<compile_context>
chip_gen: v7x
topology: tpu7x:2x2x1
jax: 0.10.0
libtpu: 0.0.40
codegen_flags: <defaults>
</compile_context>

<pallas_src>
import jax
import jax.numpy as jnp
from jax.experimental import pallas as pl
from jax.experimental.pallas import tpu as pltpu


def _round_up(a, b):
    return (a + b - 1) // b * b


def _dtl_kernel(x_ref, w1_ref, b1_ref, w2_ref, b2_ref, o_ref):
    x = x_ref[...]                                             # (TM, Dp) bf16
    # h1 = relu(x @ W1 + b1): bf16 MXU feed, f32 accumulation + f32 epilogue.
    h1 = jnp.dot(x, w1_ref[...], preferred_element_type=jnp.float32)
    h1 = jnp.maximum(h1 + b1_ref[...], 0.0)                    # (TM, Tp) f32
    # h2 = relu(h1 @ W2 + b2) + h1   (residual on h1, not on x; Tp == Dp)
    h2 = jnp.dot(h1.astype(w2_ref.dtype), w2_ref[...],
                 preferred_element_type=jnp.float32)
    h2 = jnp.maximum(h2 + b2_ref[...], 0.0) + h1               # (TM, Dp) f32
    o_ref[...] = h2.astype(o_ref.dtype)


def deep_transition_layer(x, w1, b1, w2, b2, *, tm=256, compute_dtype=jnp.bfloat16):
    """x: [N, D]; w1: [D, T]; b1: [T]; w2: [T, D]; b2: [D]. Returns [N, D]."""
    N, D = x.shape
    Din, T = w1.shape
    assert Din == D and w2.shape == (T, D)
    assert T == D, "residual `relu(linear2(h)) + h` requires tran_size == inpt_dim"

    LANE = 128     # feature dims must be lane-dense (multiples of 128)
    ROW = 16       # bf16 sublane packing: row tiles as multiples of 16
    Dp = _round_up(D, LANE)
    Tp = _round_up(T, LANE)

    # Row tiling: large tiles feed the MXU / amortize per-step overhead, but keep
    # >= 2 grid steps when possible so both TensorCores get work on v7x megacore.
    n_rows = _round_up(max(N, ROW), ROW)
    if n_rows >= 2 * tm:
        tm_eff = tm
    else:
        tm_eff = max(ROW, _round_up(pl.cdiv(n_rows, 2), ROW))
        tm_eff = min(tm_eff, n_rows)
    Np = _round_up(n_rows, tm_eff)
    grid = (Np // tm_eff,)

    out_dtype = x.dtype
    c_size = jnp.dtype(compute_dtype).itemsize

    # Zero-pad: padded columns/rows contribute exact zeros through both matmuls,
    # relu and the residual, and are sliced away at the end.
    xp = jnp.zeros((Np, Dp), compute_dtype).at[:N, :D].set(x.astype(compute_dtype))
    w1p = jnp.zeros((Dp, Tp), compute_dtype).at[:D, :T].set(w1.astype(compute_dtype))
    w2p = jnp.zeros((Tp, Dp), compute_dtype).at[:T, :D].set(w2.astype(compute_dtype))
    b1p = jnp.zeros((1, Tp), jnp.float32).at[:, :T].set(
        b1.reshape(1, T).astype(jnp.float32))
    b2p = jnp.zeros((1, Dp), jnp.float32).at[:, :D].set(
        b2.reshape(1, D).astype(jnp.float32))

    # VMEM budget: single-buffered weights/biases + double-buffered x/out row
    # tiles + f32 temporaries; 2x headroom, clamped to [32 MiB, 64 MiB] so it
    # never exceeds v7x physical VMEM but is not gated by the default scoped limit.
    needed = (
        2 * Dp * Tp * c_size                                   # W1 + W2 (1-buffered)
        + (Tp + Dp) * 4                                        # biases (f32)
        + 2 * tm_eff * Dp * c_size                             # x tile (2-buffered)
        + 2 * tm_eff * Dp * jnp.dtype(out_dtype).itemsize      # out tile (2-buffered)
        + 2 * tm_eff * Tp * 4                                  # f32 h1/h2 temporaries
    )
    vmem_limit = int(min(max(2 * needed, 32 * 1024 * 1024), 64 * 1024 * 1024))

    out = pl.pallas_call(
        _dtl_kernel,
        out_shape=jax.ShapeDtypeStruct((Np, Dp), out_dtype),
        grid_spec=pltpu.PrefetchScalarGridSpec(
            num_scalar_prefetch=0,
            grid=grid,
            in_specs=[
                # x row tile: pipelined (double-buffered) along the grid.
                pl.BlockSpec((tm_eff, Dp), lambda i: (i, 0)),
                # Weights / biases: constant index_map -> resident, single-buffered.
                pl.BlockSpec((Dp, Tp), lambda i: (0, 0), pipeline_mode=pl.Buffered(1)),
                pl.BlockSpec((1, Tp), lambda i: (0, 0), pipeline_mode=pl.Buffered(1)),
                pl.BlockSpec((Tp, Dp), lambda i: (0, 0), pipeline_mode=pl.Buffered(1)),
                pl.BlockSpec((1, Dp), lambda i: (0, 0), pipeline_mode=pl.Buffered(1)),
            ],
            out_specs=pl.BlockSpec((tm_eff, Dp), lambda i: (i, 0)),
        ),
        compiler_params=pltpu.CompilerParams(
            dimension_semantics=("parallel",),
            vmem_limit_bytes=vmem_limit,
        ),
    )(xp, w1p, b1p, w2p, b2p)

    return out[:N, :D]


def _reference(x, w1, b1, w2, b2, compute_dtype=jnp.float32):
    xc, w1c, w2c = (a.astype(compute_dtype) for a in (x, w1, w2))
    h1 = jnp.maximum(
        jnp.dot(xc, w1c, preferred_element_type=jnp.float32) + b1.reshape(1, -1), 0.0)
    h2 = jnp.maximum(
        jnp.dot(h1.astype(compute_dtype), w2c, preferred_element_type=jnp.float32)
        + b2.reshape(1, -1), 0.0) + h1
    return h2


if __name__ == "__main__":
    batch, seq = 2, 24          # N = 48 rows: exercises row padding + a 2-step grid
    inpt_dim = 32
    tran_size = 32              # must equal inpt_dim (residual is on h1)

    key = jax.random.PRNGKey(0)
    kx, k1, k2, k3, k4 = jax.random.split(key, 5)

    x = jax.random.normal(kx, (batch, seq, inpt_dim), dtype=jnp.float32)

    # nn.Linear-style init (uniform +/- 1/sqrt(fan_in)), weights stored as [in, out].
    bound1 = 1.0 / jnp.sqrt(inpt_dim)
    w1 = jax.random.uniform(k1, (inpt_dim, tran_size), jnp.float32, -bound1, bound1)
    b1 = jax.random.uniform(k2, (tran_size,), jnp.float32, -bound1, bound1)
    bound2 = 1.0 / jnp.sqrt(tran_size)
    w2 = jax.random.uniform(k3, (tran_size, inpt_dim), jnp.float32, -bound2, bound2)
    b2 = jax.random.uniform(k4, (inpt_dim,), jnp.float32, -bound2, bound2)

    # Flatten [batch, seq, D] -> [N, D] token matrix for the kernel.
    x2d = x.reshape(batch * seq, inpt_dim)

    out2d = deep_transition_layer(x2d, w1, b1, w2, b2)
    out = out2d.reshape(batch, seq, inpt_dim)
    jax.block_until_ready(out)

    # Check vs. a reference using the same bf16-feed / f32-accumulate arithmetic...
    ref_bf16 = _reference(x2d, w1, b1, w2, b2, compute_dtype=jnp.bfloat16)
    assert jnp.allclose(out2d, ref_bf16, atol=1e-2, rtol=1e-2), "mismatch vs bf16 reference"
    # ...and loosely vs. the pure-f32 PyTorch-equivalent reference.
    ref_f32 = _reference(x2d, w1, b1, w2, b2, compute_dtype=jnp.float32)
    assert jnp.allclose(out2d, ref_f32, atol=5e-2, rtol=5e-2), "mismatch vs f32 reference"

    print("KERNEL_OK")
</pallas_src>

<mosaic_0001>
module attributes {stable_mosaic.version = 11 : i64} {
  func.func @_dtl_kernel(%arg0: i32, %arg1: memref<32x128xbf16, #tpu.memory_space<vmem>>, %arg2: memref<128x128xbf16, #tpu.memory_space<vmem>>, %arg3: memref<1x128xf32, #tpu.memory_space<vmem>>, %arg4: memref<128x128xbf16, #tpu.memory_space<vmem>>, %arg5: memref<1x128xf32, #tpu.memory_space<vmem>>, %arg6: memref<32x128xf32, #tpu.memory_space<vmem>>) attributes {dimension_semantics = [#tpu.dimension_semantics<parallel>], iteration_bounds = array<i64: 2>, scalar_prefetch = 0 : i64, scratch_operands = 0 : i64, tpu.core_type = #tpu.core_type<tc>, window_params = [{transform_indices = @transform_0, window_bounds = array<i64: 32, 128>}, {pipeline_mode = #tpu.pipeline_mode<synchronous>, transform_indices = @transform_1, window_bounds = array<i64: 128, 128>}, {pipeline_mode = #tpu.pipeline_mode<synchronous>, transform_indices = @transform_2, window_bounds = array<i64: 1, 128>}, {pipeline_mode = #tpu.pipeline_mode<synchronous>, transform_indices = @transform_3, window_bounds = array<i64: 128, 128>}, {pipeline_mode = #tpu.pipeline_mode<synchronous>, transform_indices = @transform_4, window_bounds = array<i64: 1, 128>}, {transform_indices = @transform_5, window_bounds = array<i64: 32, 128>}]} {
    %c0 = arith.constant 0 : index
    %c0_0 = arith.constant 0 : index
    %0 = vector.load %arg1[%c0, %c0_0] : memref<32x128xbf16, #tpu.memory_space<vmem>>, vector<32x128xbf16>
    %c0_1 = arith.constant 0 : index
    %c0_2 = arith.constant 0 : index
    %1 = vector.load %arg2[%c0_1, %c0_2] : memref<128x128xbf16, #tpu.memory_space<vmem>>, vector<128x128xbf16>
    %cst = arith.constant dense<0.000000e+00> : vector<32x128xf32>
    %2 = tpu.matmul %0, %1, %cst {dimension_numbers = #tpu.dot_dimension_numbers<[1], [0], [0], [1], [0, 0, 1, 1], [], []>} : vector<32x128xbf16>, vector<128x128xbf16>, vector<32x128xf32> -> vector<32x128xf32>
    %c0_3 = arith.constant 0 : index
    %c0_4 = arith.constant 0 : index
    %3 = vector.load %arg3[%c0_3, %c0_4] : memref<1x128xf32, #tpu.memory_space<vmem>>, vector<1x128xf32>
    %4 = vector.broadcast %3 : vector<1x128xf32> to vector<32x128xf32>
    %5 = arith.addf %2, %4 : vector<32x128xf32>
    %cst_5 = arith.constant 0.000000e+00 : f32
    %6 = vector.broadcast %cst_5 : f32 to vector<32x128xf32>
    %7 = arith.maximumf %5, %6 : vector<32x128xf32>
    %8 = arith.truncf %7 : vector<32x128xf32> to vector<32x128xbf16>
    %c0_6 = arith.constant 0 : index
    %c0_7 = arith.constant 0 : index
    %9 = vector.load %arg4[%c0_6, %c0_7] : memref<128x128xbf16, #tpu.memory_space<vmem>>, vector<128x128xbf16>
    %cst_8 = arith.constant dense<0.000000e+00> : vector<32x128xf32>
    %10 = tpu.matmul %8, %9, %cst_8 {dimension_numbers = #tpu.dot_dimension_numbers<[1], [0], [0], [1], [0, 0, 1, 1], [], []>} : vector<32x128xbf16>, vector<128x128xbf16>, vector<32x128xf32> -> vector<32x128xf32>
    %c0_9 = arith.constant 0 : index
    %c0_10 = arith.constant 0 : index
    %11 = vector.load %arg5[%c0_9, %c0_10] : memref<1x128xf32, #tpu.memory_space<vmem>>, vector<1x128xf32>
    %12 = vector.broadcast %11 : vector<1x128xf32> to vector<32x128xf32>
    %13 = arith.addf %10, %12 : vector<32x128xf32>
    %cst_11 = arith.constant 0.000000e+00 : f32
    %14 = vector.broadcast %cst_11 : f32 to vector<32x128xf32>
    %15 = arith.maximumf %13, %14 : vector<32x128xf32>
    %16 = arith.addf %15, %7 : vector<32x128xf32>
    %c0_12 = arith.constant 0 : index
    %c0_13 = arith.constant 0 : index
    %17 = vector.load %arg6[%c0_12, %c0_13] : memref<32x128xf32, #tpu.memory_space<vmem>>, vector<32x128xf32>
    tpu.vector_store %arg6[%c0_12, %c0_13], %16 {strides = array<i32>} : memref<32x128xf32, #tpu.memory_space<vmem>>, vector<32x128xf32>,
    return
  }
  func.func @transform_0(%arg0: i32) -> (i32, i32) {
    %c0_i32 = arith.constant 0 : i32
    %c0_i32_0 = arith.constant 0 : i32
    return %arg0, %c0_i32 : i32, i32
  }
  func.func @transform_1(%arg0: i32) -> (i32, i32) {
    %c0_i32 = arith.constant 0 : i32
    %c0_i32_0 = arith.constant 0 : i32
    %c0_i32_1 = arith.constant 0 : i32
    return %c0_i32, %c0_i32_0 : i32, i32
  }
  func.func @transform_2(%arg0: i32) -> (i32, i32) {
    %c0_i32 = arith.constant 0 : i32
    %c0_i32_0 = arith.constant 0 : i32
    %c0_i32_1 = arith.constant 0 : i32
    return %c0_i32, %c0_i32_0 : i32, i32
  }
  func.func @transform_3(%arg0: i32) -> (i32, i32) {
    %c0_i32 = arith.constant 0 : i32
    %c0_i32_0 = arith.constant 0 : i32
    %c0_i32_1 = arith.constant 0 : i32
    return %c0_i32, %c0_i32_0 : i32, i32
  }
  func.func @transform_4(%arg0: i32) -> (i32, i32) {
    %c0_i32 = arith.constant 0 : i32
    %c0_i32_0 = arith.constant 0 : i32
    %c0_i32_1 = arith.constant 0 : i32
    return %c0_i32, %c0_i32_0 : i32, i32
  }
  func.func @transform_5(%arg0: i32) -> (i32, i32) {
    %c0_i32 = arith.constant 0 : i32
    %c0_i32_0 = arith.constant 0 : i32
    return %arg0, %c0_i32 : i32, i32
  }
}

</mosaic_0001>

<llo_original>
// kernel: tpu_custom_call.1
$region0: #{tpu_custom_call.1}
  #allocation0 [shape = 'u32[]', space=smem, size = 0x4, offset = 0x4, fixed_abs, tag = 'smem constant byte address 0x4 - core index']
  #allocation1 [shape = 'u32[144,128]{1,0:T(1,128)}', space=vmem, size = 0x12000, scoped, tag = 'internal scratch']
  %s0 = inlined_call_operand.hbm [shape: bf16[64,128], index: 0, kind: input, shape index: {}]
  %s1 = inlined_call_operand.hbm [shape: bf16[128,128], index: 1, kind: input, shape index: {}]
  %s2 = inlined_call_operand.vmem [shape: f32[1,128], index: 2, kind: input, shape index: {}]
  %s3 = inlined_call_operand.hbm [shape: bf16[128,128], index: 3, kind: input, shape index: {}]
  %s4 = inlined_call_operand.vmem [shape: f32[1,128], index: 4, kind: input, shape index: {}]
  %s5 = inlined_call_operand.hbm [shape: f32[64,128], index: 5, kind: output, shape index: {}]
  %s6 = sld [smem:[#allocation0]]
  $region65: #{tpu_custom_call.1} parent=0
    _
  %s8 = ssub.s32 1, %s6
  %s9 = scalar_select 0, %s8, %s6
  $region1: #{tpu_custom_call.1} parent=0
    #allocation2 [shape = 'u8[16384]{0}', space=vmem, size = 0x4000, scoped, tag = 'input window, operand 0']
    #allocation3 [shape = 's32[2]{0}', space=sflag, size = 0x8, scoped, tag = 'scoped memory for tpu_custom_call.1']
    #allocation4 [shape = 's32[2]{0}', space=sflag, size = 0x8, scoped, tag = 'scoped memory for tpu_custom_call.1']
    #allocation5 [shape = 'u8[32768]{0}', space=vmem, size = 0x8000, scoped, tag = 'input window, operand 1, single buffered']
    #allocation6 [shape = 's32[1]{0}', space=sflag, size = 0x4, scoped, tag = 'scoped memory for tpu_custom_call.1']
    #allocation7 [shape = 'u8[32768]{0}', space=vmem, size = 0x8000, scoped, tag = 'input window, operand 3, single buffered']
    #allocation8 [shape = 'u8[32768]{0}', space=vmem, size = 0x8000, scoped, tag = 'output window, operand 0']
    %10 = vsyncpa [#allocation3], 0
    %s11 = scalar_lea.sflag [#allocation3], 1
    %12 = vsyncpa %s11, 0
    %13 = vsyncpa [#allocation6], 0
    %14 = vsyncpa [#allocation4], 0
    %s15 = scalar_lea.sflag [#allocation4], 1
    %16 = vsyncpa %s15, 0
    loop: start=0, step=1, limit=4
    $region2: #{tpu_custom_call.1} parent=1 // loop_pre_header
      _
    $region3: #{tpu_custom_call.1} parent=1 // loop_header
      %s18 = sphi 0, %s22
      %p19 = scmp.ge.s32.totalorder %s18, 4
      %s28 = sphi 0, %s30
      %s31 = sphi 0, %s28
      %s32 = sphi 0, %s31
      %s48 = sphi 0, %s32
      %s52 = sphi 0, %s52
      %s54 = sphi 0, %s52
      %s55 = sphi 0, %s54
      %s69 = sphi 0, %s55
      %s73 = sphi 0, %s73
      %s75 = sphi 0, %s73
      %s76 = sphi 0, %s75
      %s90 = sphi 0, %s76
      %s94 = sphi 0, %s94
      %s96 = sphi 0, %s94
      %s97 = sphi 0, %s96
      %s111 = sphi 0, %s97
      %s115 = sphi 0, %s115
      %s117 = sphi 0, %s115
      %s118 = sphi 0, %s117
      %s132 = sphi 0, %s118
      %s138 = sphi 0, %s140
      %s141 = sphi 0, %s138
      %s142 = sphi 0, %s141
      %s158 = sphi 0, %s142
    $region4: #{tpu_custom_call.1} parent=1 // loop_header_branch
      %21 = sbr.rel (%p19) target = $region8
    $region5: #{tpu_custom_call.1} parent=1 // loop_body
      %s23 = ssub.s32 %s18, 1
      %s24 = ssub.s32 %s18, 2
      %s25 = sadd.s32 %s18, 1
      %s26 = ssub.s32 %s18, %s25
      %p27 = scmp.eq.s32.totalorder %s26, 0
      %s29 = sadd.s32 %s28, 1
      %s30 = scalar_select %p27, %s28, %s29
      %p33 = pneg %p27
      %p34 = scmp.eq.s32.totalorder %s18, 1
      %p35 = por %p33, %p34
      %p36 = scmp.ne.s32.totalorder %s28, %s31
      %p37 = scmp.eq.s32.totalorder %s18, 0
      %p38 = por %p36, %p37
      %p39 = scmp.ne.s32.totalorder %s28, %s31
      %p40 = scmp.eq.s32.totalorder %s23, 1
      %p41 = por %p39, %p40
      %p42 = scmp.ne.s32.totalorder %s31, %s32
      %p43 = scmp.eq.s32.totalorder %s23, 0
      %p44 = por %p42, %p43
      %p45 = scmp.ne.s32.totalorder %s31, %s32
      %p46 = scmp.eq.s32.totalorder %s24, 1
      %p47 = por %p45, %p46
      %p49 = scmp.ne.s32.totalorder %s32, %s48
      %p50 = scmp.eq.s32.totalorder %s24, 0
      %p51 = por %p49, %p50
      %s53 = sadd.s32 %s52, 1
      %p56 = scmp.eq.s32.totalorder %s18, 1
      %p57 = scmp.ne.s32.totalorder %s52, %s54
      %p58 = scmp.eq.s32.totalorder %s18, 0
      %p59 = por %p57, %p58
      %p60 = scmp.ne.s32.totalorder %s52, %s54
      %p61 = scmp.eq.s32.totalorder %s23, 1
      %p62 = por %p60, %p61
      %p63 = scmp.ne.s32.totalorder %s54, %s55
      %p64 = scmp.eq.s32.totalorder %s23, 0
      %p65 = por %p63, %p64
      %p66 = scmp.ne.s32.totalorder %s54, %s55
      %p67 = scmp.eq.s32.totalorder %s24, 1
      %p68 = por %p66, %p67
      %p70 = scmp.ne.s32.totalorder %s55, %s69
      %p71 = scmp.eq.s32.totalorder %s24, 0
      %p72 = por %p70, %p71
      %s74 = sadd.s32 %s73, 1
      %p77 = scmp.eq.s32.totalorder %s18, 1
      %p78 = scmp.ne.s32.totalorder %s73, %s75
      %p79 = scmp.eq.s32.totalorder %s18, 0
      %p80 = por %p78, %p79
      %p81 = scmp.ne.s32.totalorder %s73, %s75
      %p82 = scmp.eq.s32.totalorder %s23, 1
      %p83 = por %p81, %p82
      %p84 = scmp.ne.s32.totalorder %s75, %s76
      %p85 = scmp.eq.s32.totalorder %s23, 0
      %p86 = por %p84, %p85
      %p87 = scmp.ne.s32.totalorder %s75, %s76
      %p88 = scmp.eq.s32.totalorder %s24, 1
      %p89 = por %p87, %p88
      %p91 = scmp.ne.s32.totalorder %s76, %s90
      %p92 = scmp.eq.s32.totalorder %s24, 0
      %p93 = por %p91, %p92
      %s95 = sadd.s32 %s94, 1
      %p98 = scmp.eq.s32.totalorder %s18, 1
      %p99 = scmp.ne.s32.totalorder %s94, %s96
      %p100 = scmp.eq.s32.totalorder %s18, 0
      %p101 = por %p99, %p100
      %p102 = scmp.ne.s32.totalorder %s94, %s96
      %p103 = scmp.eq.s32.totalorder %s23, 1
      %p104 = por %p102, %p103
      %p105 = scmp.ne.s32.totalorder %s96, %s97
      %p106 = scmp.eq.s32.totalorder %s23, 0
      %p107 = por %p105, %p106
      %p108 = scmp.ne.s32.totalorder %s96, %s97
      %p109 = scmp.eq.s32.totalorder %s24, 1
      %p110 = por %p108, %p109
      %p112 = scmp.ne.s32.totalorder %s97, %s111
      %p113 = scmp.eq.s32.totalorder %s24, 0
      %p114 = por %p112, %p113
      %s116 = sadd.s32 %s115, 1
      %p119 = scmp.eq.s32.totalorder %s18, 1
      %p120 = scmp.ne.s32.totalorder %s115, %s117
      %p121 = scmp.eq.s32.totalorder %s18, 0
      %p122 = por %p120, %p121
      %p123 = scmp.ne.s32.totalorder %s115, %s117
      %p124 = scmp.eq.s32.totalorder %s23, 1
      %p125 = por %p123, %p124
      %p126 = scmp.ne.s32.totalorder %s117, %s118
      %p127 = scmp.eq.s32.totalorder %s23, 0
      %p128 = por %p126, %p127
      %p129 = scmp.ne.s32.totalorder %s117, %s118
      %p130 = scmp.eq.s32.totalorder %s24, 1
      %p131 = por %p129, %p130
      %p133 = scmp.ne.s32.totalorder %s118, %s132
      %p134 = scmp.eq.s32.totalorder %s24, 0
      %p135 = por %p133, %p134
      %s136 = ssub.s32 %s18, %s25
      %p137 = scmp.eq.s32.totalorder %s136, 0
      %s139 = sadd.s32 %s138, 1
      %s140 = scalar_select %p137, %s138, %s139
      %p143 = pneg %p137
      %p144 = scmp.eq.s32.totalorder %s18, 1
      %p145 = por %p143, %p144
      %p146 = scmp.ne.s32.totalorder %s138, %s141
      %p147 = scmp.eq.s32.totalorder %s18, 0
      %p148 = por %p146, %p147
      %p149 = scmp.ne.s32.totalorder %s138, %s141
      %p150 = scmp.eq.s32.totalorder %s23, 1
      %p151 = por %p149, %p150
      %p152 = scmp.ne.s32.totalorder %s141, %s142
      %p153 = scmp.eq.s32.totalorder %s23, 0
      %p154 = por %p152, %p153
      %p155 = scmp.ne.s32.totalorder %s141, %s142
      %p156 = scmp.eq.s32.totalorder %s24, 1
      %p157 = por %p155, %p156
      %p159 = scmp.ne.s32.totalorder %s142, %s158
      %p160 = scmp.eq.s32.totalorder %s24, 0
      %p161 = por %p159, %p160
      %p162 = scmp.le.s32.totalorder 1, %s18
      %p163 = scmp.lt.s32.totalorder %s18, 3
      %p164 = pnand %p162, %p163
      %p165 = pneg %p164
      // Predicated region
      $region9: #{tpu_custom_call.1} parent=5 // pred_check
        _
      $region10: #{tpu_custom_call.1} parent=5 // pred_check_branch
        %167 = sbr.rel (%p164) target = $region12
      $region11: #{tpu_custom_call.1} parent=5 // pred_region
        %s168 = ssub.s32 %s18, 1
        // Predicated region
        $region13: #{tpu_custom_call.1} parent=11 // pred_check
          %p169 = pneg %p65
        $region14: #{tpu_custom_call.1} parent=11 // pred_check_branch
          %171 = sbr.rel (%p169) target = $region16
        $region15: #{tpu_custom_call.1} parent=11 // pred_region
          %s173 = ssub.s32 1024, 1024
          %174 = vsyncadd [#allocation6], %s173
          %s175 = sshll.u32 [#allocation5], 4
          %s176 = int_to_ptr.vmem [resolvable:$true] %s175
          %181 = dma.hbm_to_vmem [thread:$0]  %s1, 1024, %s176, [#allocation6], 64, 64, 4
        $region16: #{tpu_custom_call.1} parent=11 // pred_fallthru
          _
        // Predicated region
        $region17: #{tpu_custom_call.1} parent=11 // pred_check
          %p182 = pneg %p86
        $region18: #{tpu_custom_call.1} parent=11 // pred_check_branch
          %184 = sbr.rel (%p182) target = $region20
        $region19: #{tpu_custom_call.1} parent=11 // pred_region
          _
        $region20: #{tpu_custom_call.1} parent=11 // pred_fallthru
          _
        // Predicated region
        $region21: #{tpu_custom_call.1} parent=11 // pred_check
          %p185 = pneg %p107
        $region22: #{tpu_custom_call.1} parent=11 // pred_check_branch
          %187 = sbr.rel (%p185) target = $region24
        $region23: #{tpu_custom_call.1} parent=11 // pred_region
          %s189 = ssub.s32 1024, 1024
          %190 = vsyncadd [#allocation6], %s189
          %s191 = sshll.u32 [#allocation7], 4
          %s192 = int_to_ptr.vmem [resolvable:$true] %s191
          %197 = dma.hbm_to_vmem [thread:$0]  %s3, 1024, %s192, [#allocation6], 64, 64, 4
        $region24: #{tpu_custom_call.1} parent=11 // pred_fallthru
          _
        // Predicated region
        $region25: #{tpu_custom_call.1} parent=11 // pred_check
          %p198 = pneg %p128
        $region26: #{tpu_custom_call.1} parent=11 // pred_check_branch
          %200 = sbr.rel (%p198) target = $region28
        $region27: #{tpu_custom_call.1} parent=11 // pred_region
          _
        $region28: #{tpu_custom_call.1} parent=11 // pred_fallthru
          _
      $region12: #{tpu_custom_call.1} parent=5 // pred_fallthru
        _
      %p201 = scmp.lt.s32.totalorder %s18, 2
      // Predicated region
      $region29: #{tpu_custom_call.1} parent=5 // pred_check
        %p202 = pneg %p201
      $region30: #{tpu_custom_call.1} parent=5 // pred_check_branch
        %204 = sbr.rel (%p202) target = $region32
      $region31: #{tpu_custom_call.1} parent=5 // pred_region
        // Predicated region
        $region33: #{tpu_custom_call.1} parent=31 // pred_check
          %p205 = pneg %p38
        $region34: #{tpu_custom_call.1} parent=31 // pred_check_branch
          %207 = sbr.rel (%p205) target = $region36
        $region35: #{tpu_custom_call.1} parent=31 // pred_region
          %s208 = sand.u32 %s28, 1
          %s209 = scalar_lea.sflag [#allocation3], %s208
          %s210 = sand.u32 %s28, 1
          %s211 = smul.addr %s210, 16
          %s212 = scalar_lea.vmem [#allocation2], %s211
          %s213 = smul.u32 4, %s18
          %s215 = ssub.s32 256, 256
          %216 = vsyncadd %s209, %s215
          %s217 = smul.addr %s213, 64
          %s218 = scalar_lea.hbm %s0, %s217
          %s219 = sshll.u32 %s212, 4
          %s220 = int_to_ptr.vmem [resolvable:$true] %s219
          %225 = dma.hbm_to_vmem [thread:$0]  %s218, 256, %s220, %s209, 64, 64, 4
        $region36: #{tpu_custom_call.1} parent=31 // pred_fallthru
          _
      $region32: #{tpu_custom_call.1} parent=5 // pred_fallthru
        _
      %p226 = scmp.le.s32.totalorder 1, %s18
      %p227 = scmp.lt.s32.totalorder %s18, 3
      %p228 = pnand %p226, %p227
      %p229 = pneg %p228
      // Predicated region
      $region37: #{tpu_custom_call.1} parent=5 // pred_check
        _
      $region38: #{tpu_custom_call.1} parent=5 // pred_check_branch
        %231 = sbr.rel (%p228) target = $region40
      $region39: #{tpu_custom_call.1} parent=5 // pred_region
        %s232 = ssub.s32 %s18, 1
        %s233 = sand.u32 %s31, 1
        %s234 = scalar_lea.sflag [#allocation3], %s233
        %s235 = sand.u32 %s31, 1
        %s236 = smul.addr %s235, 16
        %s237 = scalar_lea.vmem [#allocation2], %s236
        // Predicated region
        $region41: #{tpu_custom_call.1} parent=39 // pred_check
          %p238 = pneg %p44
        $region42: #{tpu_custom_call.1} parent=39 // pred_check_branch
          %240 = sbr.rel (%p238) target = $region44
        $region43: #{tpu_custom_call.1} parent=39 // pred_region
          %241 = dma.done %s234, 256
        $region44: #{tpu_custom_call.1} parent=39 // pred_fallthru
          _
        // Predicated region
        $region45: #{tpu_custom_call.1} parent=39 // pred_check
          %p242 = pneg %p65
        $region46: #{tpu_custom_call.1} parent=39 // pred_check_branch
          %244 = sbr.rel (%p242) target = $region48
        $region47: #{tpu_custom_call.1} parent=39 // pred_region
          %245 = dma.done [#allocation6], 1024
        $region48: #{tpu_custom_call.1} parent=39 // pred_fallthru
          _
        // Predicated region
        $region49: #{tpu_custom_call.1} parent=39 // pred_check
          %p246 = pneg %p107
        $region50: #{tpu_custom_call.1} parent=39 // pred_check_branch
          %248 = sbr.rel (%p246) target = $region52
        $region51: #{tpu_custom_call.1} parent=39 // pred_region
          %249 = dma.done [#allocation6], 1024
        $region52: #{tpu_custom_call.1} parent=39 // pred_fallthru
          _
        %s250 = sand.u32 %s31, 1
        %s251 = scalar_lea.sflag [#allocation3], %s250
        %s252 = sand.u32 %s31, 1
        %s253 = smul.addr %s252, 16
        %s254 = scalar_lea.vmem [#allocation2], %s253
        %p255 = pneg %p44
        %p256 = pneg %p41
        %p257 = pneg %p65
        %p258 = pneg %p62
        %p259 = pneg %p86
        %p260 = pneg %p83
        %p261 = pneg %p107
        %p262 = pneg %p104
        %p263 = pneg %p128
        %p264 = pneg %p125
        %p265 = pneg %p154
        %p266 = pneg %p151
        %s267 = sand.u32 %s141, 1
        %s268 = scalar_lea.sflag [#allocation4], %s267
        %s269 = sand.u32 %s141, 1
        %s270 = smul.addr %s269, 32
        %s271 = scalar_lea.vmem [#allocation8], %s270
        %s272 = smul.u32 4, %s23
        %s273 = smul.u32 4, %s23
        %v275 = vld [vmem:[%s237] sm:$0xf]
        %v276 = vld [vmem:[%s237 + $0x4] sm:$0xf]
        %v277 = vld [vmem:[%s237 + $0x8] sm:$0xf]
        %v278 = vld [vmem:[%s237 + $0xc] sm:$0xf]
        %v279 = vld [vmem:[#allocation5] sm:$0xf]
        %v280 = vld [vmem:[#allocation5 + $0x4] sm:$0xf]
        %v281 = vld [vmem:[#allocation5 + $0x8] sm:$0xf]
        %v282 = vld [vmem:[#allocation5 + $0xc] sm:$0xf]
        %v283 = vld [vmem:[#allocation5 + $0x10] sm:$0xf]
        %v284 = vld [vmem:[#allocation5 + $0x14] sm:$0xf]
        %v285 = vld [vmem:[#allocation5 + $0x18] sm:$0xf]
        %v286 = vld [vmem:[#allocation5 + $0x1c] sm:$0xf]
        %v287 = vld [vmem:[#allocation5 + $0x20] sm:$0xf]
        %v288 = vld [vmem:[#allocation5 + $0x24] sm:$0xf]
        %v289 = vld [vmem:[#allocation5 + $0x28] sm:$0xf]
        %v290 = vld [vmem:[#allocation5 + $0x2c] sm:$0xf]
        %v291 = vld [vmem:[#allocation5 + $0x30] sm:$0xf]
        %v292 = vld [vmem:[#allocation5 + $0x34] sm:$0xf]
        %v293 = vld [vmem:[#allocation5 + $0x38] sm:$0xf]
        %v294 = vld [vmem:[#allocation5 + $0x3c] sm:$0xf]
        %v295 = vld [vmem:[%s2] sm:$0x1]
        %v297 = vlaneseq
        %v298 = vshrl.u32 %v297, 7
        %v299 = vsub.s32 0, %v298
        %v300 = vrot.slane %v295, %v299
        %v306 = vunpack.c.l.b16 %v275
        %v307 = vunpack.c.l.b16 %v276
        %v308 = vunpack.c.l.b16 %v277
        %v309 = vunpack.c.l.b16 %v278
        %v310 = vpack.c.b16 %v307, %v306
        %v311 = vpack.c.b16 %v309, %v308
        %v330 = vunpack.c.l.b16 %v279
        %v331 = vunpack.c.l.b16 %v280
        %v332 = vunpack.c.l.b16 %v281
        %v333 = vunpack.c.l.b16 %v282
        %v334 = vunpack.c.l.b16 %v283
        %v335 = vunpack.c.l.b16 %v284
        %v336 = vunpack.c.l.b16 %v285
        %v337 = vunpack.c.l.b16 %v286
        %v338 = vunpack.c.l.b16 %v287
        %v339 = vunpack.c.l.b16 %v288
        %v340 = vunpack.c.l.b16 %v289
        %v341 = vunpack.c.l.b16 %v290
        %v342 = vunpack.c.l.b16 %v291
        %v343 = vunpack.c.l.b16 %v292
        %v344 = vunpack.c.l.b16 %v293
        %v345 = vunpack.c.l.b16 %v294
        %v346 = vpack.c.b16 %v331, %v330
        %v347 = vpack.c.b16 %v333, %v332
        %v348 = vpack.c.b16 %v335, %v334
        %v349 = vpack.c.b16 %v337, %v336
        %v350 = vpack.c.b16 %v339, %v338
        %v351 = vpack.c.b16 %v341, %v340
        %v352 = vpack.c.b16 %v343, %v342
        %v353 = vpack.c.b16 %v345, %v344
        %362 = vmatprep.subr.bf16.mxu0 0
        %363 = vmatpush1.bf16.msra.mxu0 %v346
        %364 = vmatprep.subr.bf16.mxu0 0
        %365 = vmatpush1.bf16.msra.mxu0 %v347
        %366 = vmatprep.subr.bf16.mxu0 0
        %367 = vmatpush1.bf16.msra.mxu0 %v348
        %368 = vmatprep.subr.bf16.mxu0 0
        %369 = vmatpush1.bf16.msra.mxu0 %v349
        %370 = vmatprep.subr.bf16.mxu0 0
        %371 = vmatpush1.bf16.msra.mxu0 %v350
        %372 = vmatprep.subr.bf16.mxu0 0
        %373 = vmatpush1.bf16.msra.mxu0 %v351
        %374 = vmatprep.subr.bf16.mxu0 0
        %375 = vmatpush1.bf16.msra.mxu0 %v352
        %376 = vmatprep.subr.bf16.mxu0 0
        %377 = vmatpush1.bf16.msra.mxu0 %v353
        %378 = vmatprep.subr.bf16.mxu0 0
        %379 = vmatpush1.bf16.msra.mxu0 0
        %380 = vmatprep.subr.bf16.mxu0 0
        %381 = vmatpush1.bf16.msra.mxu0 0
        %382 = vmatprep.subr.bf16.mxu0 0
        %383 = vmatpush1.bf16.msra.mxu0 0
        %384 = vmatprep.subr.bf16.mxu0 0
        %385 = vmatpush1.bf16.msra.mxu0 0
        %386 = vmatprep.subr.bf16.mxu0 0
        %387 = vmatpush1.bf16.msra.mxu0 0
        %388 = vmatprep.subr.bf16.mxu0 0
        %389 = vmatpush1.bf16.msra.mxu0 0
        %390 = vmatprep.subr.bf16.mxu0 0
        %391 = vmatpush1.bf16.msra.mxu0 0
        %392 = vmatprep.subr.bf16.mxu0 0
        %393 = vmatpush1.bf16.msra.mxu0 0
        %394 = vmatprep.mubr.bf16.mxu0 0
        %395 = vmatmul.mubr.bf16.gmra.mrb[0].mxu0 %v310
        %v396 = vpop.f32.mrb[0].mxu0
        %v397 = vadd.f32 %v300, %v396
        %v398 = vpop.f32.mrb[0].mxu0
        %v399 = vpop.f32.mrb[0].mxu0
        %v400 = vadd.f32 %v300, %v399
        %v401 = vpop.f32.mrb[0].mxu0
        %402 = vmatprep.mubr.bf16.mxu0 0
        %403 = vmatmul.mubr.bf16.gmra.mrb[0].mxu0 %v311
        %v404 = vpop.f32.mrb[0].mxu0
        %v405 = vadd.f32 %v300, %v404
        %v406 = vpop.f32.mrb[0].mxu0
        %v407 = vpop.f32.mrb[0].mxu0
        %v408 = vadd.f32 %v300, %v407
        %v409 = vpop.f32.mrb[0].mxu0
        %410 = vdwg.mxu0
        %v411 = vmax.f32 %v397, 0.0
        %v412 = vmax.f32 %v400, 0.0
        %v413 = vmax.f32 %v405, 0.0
        %v414 = vmax.f32 %v408, 0.0
        %v415 = vpack.c.bf16 %v412, %v411
        %v416 = vpack.c.bf16 %v414, %v413
        %v417 = vld [vmem:[#allocation7] sm:$0xf]
        %v418 = vld [vmem:[#allocation7 + $0x4] sm:$0xf]
        %v419 = vld [vmem:[#allocation7 + $0x8] sm:$0xf]
        %v420 = vld [vmem:[#allocation7 + $0xc] sm:$0xf]
        %v421 = vld [vmem:[#allocation7 + $0x10] sm:$0xf]
        %v422 = vld [vmem:[#allocation7 + $0x14] sm:$0xf]
        %v423 = vld [vmem:[#allocation7 + $0x18] sm:$0xf]
        %v424 = vld [vmem:[#allocation7 + $0x1c] sm:$0xf]
        %v425 = vld [vmem:[#allocation7 + $0x20] sm:$0xf]
        %v426 = vld [vmem:[#allocation7 + $0x24] sm:$0xf]
        %v427 = vld [vmem:[#allocation7 + $0x28] sm:$0xf]
        %v428 = vld [vmem:[#allocation7 + $0x2c] sm:$0xf]
        %v429 = vld [vmem:[#allocation7 + $0x30] sm:$0xf]
        %v430 = vld [vmem:[#allocation7 + $0x34] sm:$0xf]
        %v431 = vld [vmem:[#allocation7 + $0x38] sm:$0xf]
        %v432 = vld [vmem:[#allocation7 + $0x3c] sm:$0xf]
        %v433 = vld [vmem:[%s4] sm:$0x1]
        %v435 = vlaneseq
        %v436 = vshrl.u32 %v435, 7
        %v437 = vsub.s32 0, %v436
        %v438 = vrot.slane %v433, %v437
        %v456 = vunpack.c.l.b16 %v417
        %v457 = vunpack.c.l.b16 %v418
        %v458 = vunpack.c.l.b16 %v419
        %v459 = vunpack.c.l.b16 %v420
        %v460 = vunpack.c.l.b16 %v421
        %v461 = vunpack.c.l.b16 %v422
        %v462 = vunpack.c.l.b16 %v423
        %v463 = vunpack.c.l.b16 %v424
        %v464 = vunpack.c.l.b16 %v425
        %v465 = vunpack.c.l.b16 %v426
        %v466 = vunpack.c.l.b16 %v427
        %v467 = vunpack.c.l.b16 %v428
        %v468 = vunpack.c.l.b16 %v429
        %v469 = vunpack.c.l.b16 %v430
        %v470 = vunpack.c.l.b16 %v431
        %v471 = vunpack.c.l.b16 %v432
        %v472 = vpack.c.b16 %v457, %v456
        %v473 = vpack.c.b16 %v459, %v458
        %v474 = vpack.c.b16 %v461, %v460
        %v475 = vpack.c.b16 %v463, %v462
        %v476 = vpack.c.b16 %v465, %v464
        %v477 = vpack.c.b16 %v467, %v466
        %v478 = vpack.c.b16 %v469, %v468
        %v479 = vpack.c.b16 %v471, %v470
        %488 = vmatprep.subr.bf16.mxu0 0
        %489 = vmatpush1.bf16.msra.mxu0 %v472
        %490 = vmatprep.subr.bf16.mxu0 0
        %491 = vmatpush1.bf16.msra.mxu0 %v473
        %492 = vmatprep.subr.bf16.mxu0 0
        %493 = vmatpush1.bf16.msra.mxu0 %v474
        %494 = vmatprep.subr.bf16.mxu0 0
        %495 = vmatpush1.bf16.msra.mxu0 %v475
        %496 = vmatprep.subr.bf16.mxu0 0
        %497 = vmatpush1.bf16.msra.mxu0 %v476
        %498 = vmatprep.subr.bf16.mxu0 0
        %499 = vmatpush1.bf16.msra.mxu0 %v477
        %500 = vmatprep.subr.bf16.mxu0 0
        %501 = vmatpush1.bf16.msra.mxu0 %v478
        %502 = vmatprep.subr.bf16.mxu0 0
        %503 = vmatpush1.bf16.msra.mxu0 %v479
        %504 = vmatprep.subr.bf16.mxu0 0
        %505 = vmatpush1.bf16.msra.mxu0 0
        %506 = vmatprep.subr.bf16.mxu0 0
        %507 = vmatpush1.bf16.msra.mxu0 0
        %508 = vmatprep.subr.bf16.mxu0 0
        %509 = vmatpush1.bf16.msra.mxu0 0
        %510 = vmatprep.subr.bf16.mxu0 0
        %511 = vmatpush1.bf16.msra.mxu0 0
        %512 = vmatprep.subr.bf16.mxu0 0
        %513 = vmatpush1.bf16.msra.mxu0 0
        %514 = vmatprep.subr.bf16.mxu0 0
        %515 = vmatpush1.bf16.msra.mxu0 0
        %516 = vmatprep.subr.bf16.mxu0 0
        %517 = vmatpush1.bf16.msra.mxu0 0
        %518 = vmatprep.subr.bf16.mxu0 0
        %519 = vmatpush1.bf16.msra.mxu0 0
        %520 = vmatprep.mubr.bf16.mxu0 0
        %521 = vmatmul.mubr.bf16.gmra.mrb[0].mxu0 %v415
        %v522 = vpop.f32.mrb[0].mxu0
        %v523 = vadd.f32 %v438, %v522
        %v524 = vpop.f32.mrb[0].mxu0
        %v525 = vpop.f32.mrb[0].mxu0
        %v526 = vadd.f32 %v438, %v525
        %v527 = vpop.f32.mrb[0].mxu0
        %528 = vmatprep.mubr.bf16.mxu0 0
        %529 = vmatmul.mubr.bf16.gmra.mrb[0].mxu0 %v416
        %v530 = vpop.f32.mrb[0].mxu0
        %v531 = vadd.f32 %v438, %v530
        %v532 = vpop.f32.mrb[0].mxu0
        %v533 = vpop.f32.mrb[0].mxu0
        %v534 = vadd.f32 %v438, %v533
        %v535 = vpop.f32.mrb[0].mxu0
        %536 = vdwg.mxu0
        %v537 = vmax.f32 %v523, 0.0
        %v538 = vmax.f32 %v526, 0.0
        %v539 = vmax.f32 %v531, 0.0
        %v540 = vmax.f32 %v534, 0.0
        %v541 = vadd.f32 %v537, %v411
        %v542 = vadd.f32 %v538, %v412
        %v543 = vadd.f32 %v539, %v413
        %v544 = vadd.f32 %v540, %v414
        %545 = vst [vmem:[%s271] sm:$0xff] %v541
        %546 = vst [vmem:[%s271 + $0x8] sm:$0xff] %v542
        %547 = vst [vmem:[%s271 + $0x10] sm:$0xff] %v543
        %548 = vst [vmem:[%s271 + $0x18] sm:$0xff] %v544
        %s549 = sand.u32 %s141, 1
        %s550 = scalar_lea.sflag [#allocation4], %s549
        %s551 = sand.u32 %s141, 1
        %s552 = smul.addr %s551, 32
        %s553 = scalar_lea.vmem [#allocation8], %s552
        // Predicated region
        $region53: #{tpu_custom_call.1} parent=39 // pred_check
          %p554 = pneg %p151
        $region54: #{tpu_custom_call.1} parent=39 // pred_check_branch
          %556 = sbr.rel (%p554) target = $region56
        $region55: #{tpu_custom_call.1} parent=39 // pred_region
          %s557 = smul.u32 4, %s23
          %s559 = ssub.s32 512, 512
          %560 = vsyncadd %s550, %s559
          %s561 = smul.addr %s557, 128
          %s562 = scalar_lea.hbm %s5, %s561
          %s563 = sshll.u32 %s553, 4
          %s564 = int_to_ptr.vmem [resolvable:$true] %s563
          %569 = dma.vmem_to_hbm [thread:$0]  %s564, 512, %s562, %s550, 128, 128, 8
        $region56: #{tpu_custom_call.1} parent=39 // pred_fallthru
          _
      $region40: #{tpu_custom_call.1} parent=5 // pred_fallthru
        _
      %p570 = scmp.le.s32.totalorder 2, %s18
      // Predicated region
      $region57: #{tpu_custom_call.1} parent=5 // pred_check
        %p571 = pneg %p570
      $region58: #{tpu_custom_call.1} parent=5 // pred_check_branch
        %573 = sbr.rel (%p571) target = $region60
      $region59: #{tpu_custom_call.1} parent=5 // pred_region
        %s574 = ssub.s32 %s18, 2
        // Predicated region
        $region61: #{tpu_custom_call.1} parent=59 // pred_check
          %p575 = pneg %p157
        $region62: #{tpu_custom_call.1} parent=59 // pred_check_branch
          %577 = sbr.rel (%p575) target = $region64
        $region63: #{tpu_custom_call.1} parent=59 // pred_region
          %s578 = sand.u32 %s142, 1
          %s579 = scalar_lea.sflag [#allocation4], %s578
          %s580 = sand.u32 %s142, 1
          %s581 = smul.addr %s580, 32
          %s582 = scalar_lea.vmem [#allocation8], %s581
          %583 = dma.done %s579, 512
        $region64: #{tpu_custom_call.1} parent=59 // pred_fallthru
          _
      $region60: #{tpu_custom_call.1} parent=5 // pred_fallthru
        _
    $region6: #{tpu_custom_call.1} parent=1 // loop_footer
      %s22 = sadd.s32 1, %s18
    $region7: #{tpu_custom_call.1} parent=1 // loop_footer_branch
      %17 = sbr.rel target = $region3
    $region8: #{tpu_custom_call.1} parent=1 // loop_exit
      _
    %584 = vsyncpa [#allocation3], 1
    %s585 = scalar_lea.sflag [#allocation3], 1
    %586 = vsyncpa %s585, 1
    %587 = vsyncpa [#allocation6], 1
    %588 = vsyncpa [#allocation4], 1
    %s589 = scalar_lea.sflag [#allocation4], 1
    %590 = vsyncpa %s589, 1

</llo_original>
